<compile_context>
chip_gen: v5e
topology: v5e:2x2
jax: 0.10.0
libtpu: 0.0.40
codegen_flags: <defaults>
</compile_context>

<pallas_src>
import jax
import jax.numpy as jnp
from jax.experimental import pallas as pl
from jax.experimental.pallas import tpu as pltpu

_LANE = 128
_SUBLANE = 8


def perceptron_kernel(x_ref, w1_ref, b1_ref, w2_ref, b2_ref, y_ref, h_ref):
    # fc1 + ReLU (f32 accumulation on the MXU)
    x = x_ref[...]
    h = jnp.dot(x, w1_ref[...], preferred_element_type=jnp.float32) + b1_ref[...]
    h = jnp.maximum(h, 0.0)
    # Lane-dense store of the (padded) hidden activation.
    h_ref[...] = h.astype(h_ref.dtype)
    # fc2 — keep h in registers, cast to the weight dtype for the MXU input.
    y = jnp.dot(h.astype(w2_ref.dtype), w2_ref[...],
                preferred_element_type=jnp.float32) + b2_ref[...]
    y_ref[...] = y.astype(y_ref.dtype)


def perceptron_forward(x, w1, b1, w2, b2, *, block_batch=512, compute_dtype=None):
    """Pallas implementation of Perceptron.forward: returns (y, h, h).

    x:  (B, D_in)
    w1: (D_in, latent), b1: (latent,)
    w2: (latent, D_out), b2: (D_out,)
    """
    B, D_in = x.shape
    latent = w1.shape[1]
    D_out = w2.shape[1]
    out_dtype = x.dtype

    if compute_dtype is not None:
        x = x.astype(compute_dtype)
        w1 = w1.astype(compute_dtype)
        b1 = b1.astype(compute_dtype)
        w2 = w2.astype(compute_dtype)
        b2 = b2.astype(compute_dtype)

    # Lane-pad the hidden dimension to a multiple of 128 (zero columns of W1 /
    # zero entries of b1 / zero rows of W2 do not change the math).
    latent_pad = max(_LANE, ((latent + _LANE - 1) // _LANE) * _LANE)
    w1p = jnp.zeros((D_in, latent_pad), w1.dtype).at[:, :latent].set(w1)
    b1p = jnp.zeros((1, latent_pad), b1.dtype).at[0, :latent].set(b1)
    w2p = jnp.zeros((latent_pad, D_out), w2.dtype).at[:latent, :].set(w2)
    b2p = b2.reshape(1, D_out)

    # Batch tile: multiple of 8 sublanes, capped at block_batch (v7x-safe).
    TB = min(block_batch, ((B + _SUBLANE - 1) // _SUBLANE) * _SUBLANE)
    TB = max(_SUBLANE, (TB // _SUBLANE) * _SUBLANE)
    B_pad = ((B + TB - 1) // TB) * TB
    if B_pad != B:
        x_in = jnp.zeros((B_pad, D_in), x.dtype).at[:B, :].set(x)
    else:
        x_in = x

    grid = (B_pad // TB,)

    y_p, h_p = pl.pallas_call(
        perceptron_kernel,
        out_shape=(
            jax.ShapeDtypeStruct((B_pad, D_out), out_dtype),
            jax.ShapeDtypeStruct((B_pad, latent_pad), out_dtype),
        ),
        grid=grid,
        in_specs=[
            # x: streamed per batch tile
            pl.BlockSpec((TB, D_in), lambda i: (i, 0)),
            # weights / biases: constant block index -> resident in VMEM
            pl.BlockSpec((D_in, latent_pad), lambda i: (0, 0)),
            pl.BlockSpec((1, latent_pad), lambda i: (0, 0)),
            pl.BlockSpec((latent_pad, D_out), lambda i: (0, 0)),
            pl.BlockSpec((1, D_out), lambda i: (0, 0)),
        ],
        out_specs=(
            pl.BlockSpec((TB, D_out), lambda i: (i, 0)),
            pl.BlockSpec((TB, latent_pad), lambda i: (i, 0)),
        ),
        compiler_params=pltpu.CompilerParams(
            dimension_semantics=("parallel",),
        ),
    )(x_in, w1p, b1p, w2p, b2p)

    y = y_p[:B, :]
    h = h_p[:B, :latent]
    return y, h, h


def init_linear_params(key, in_features, out_features, dtype=jnp.float32):
    """Deterministic init mimicking PyTorch nn.Linear default (uniform +/- 1/sqrt(fan_in))."""
    kw, kb = jax.random.split(key)
    bound = 1.0 / (in_features ** 0.5)
    # Stored as (in, out) so the kernel does x @ W.
    w = jax.random.uniform(kw, (in_features, out_features), dtype, -bound, bound)
    b = jax.random.uniform(kb, (out_features,), dtype, -bound, bound)
    return w, b


if __name__ == "__main__":
    # Small shapes consistent with the module:
    #   bert_output_dim=128, latent_dim=32, gpt_input_dim=128, batch=8
    # (This regime is launch-overhead dominated; the tiling pays off at large B.)
    bert_output_dim = 128
    gpt_input_dim = 128
    latent_dim = 32
    batch = 8

    key = jax.random.PRNGKey(0)
    kx, k1, k2 = jax.random.split(key, 3)

    x = jax.random.normal(kx, (batch, bert_output_dim), jnp.float32)
    w1, b1 = init_linear_params(k1, bert_output_dim, latent_dim)
    w2, b2 = init_linear_params(k2, latent_dim, gpt_input_dim)

    y, h1, h2 = perceptron_forward(x, w1, b1, w2, b2)
    jax.block_until_ready((y, h1, h2))

    # Sanity check against a pure-JAX reference.
    h_ref = jnp.maximum(x @ w1 + b1, 0.0)
    y_ref = h_ref @ w2 + b2
    assert y.shape == (batch, gpt_input_dim)
    assert h1.shape == (batch, latent_dim)
    assert jnp.allclose(h1, h_ref, atol=1e-5, rtol=1e-5)
    assert jnp.allclose(y, y_ref, atol=1e-5, rtol=1e-5)
    assert jnp.array_equal(h1, h2)

    print("KERNEL_OK")
</pallas_src>

<mosaic_0001>
module attributes {stable_mosaic.version = 11 : i64} {
  func.func @perceptron_kernel(%arg0: i32, %arg1: memref<8x128xf32, #tpu.memory_space<vmem>>, %arg2: memref<128x128xf32, #tpu.memory_space<vmem>>, %arg3: memref<1x128xf32, #tpu.memory_space<vmem>>, %arg4: memref<128x128xf32, #tpu.memory_space<vmem>>, %arg5: memref<1x128xf32, #tpu.memory_space<vmem>>, %arg6: memref<8x128xf32, #tpu.memory_space<vmem>>, %arg7: memref<8x128xf32, #tpu.memory_space<vmem>>) attributes {dimension_semantics = [#tpu.dimension_semantics<parallel>], iteration_bounds = array<i64: 1>, scalar_prefetch = 0 : i64, scratch_operands = 0 : i64, tpu.core_type = #tpu.core_type<tc>, window_params = [{transform_indices = @transform_0, window_bounds = array<i64: 8, 128>}, {pipeline_mode = #tpu.pipeline_mode<synchronous>, transform_indices = @transform_1, window_bounds = array<i64: 128, 128>}, {pipeline_mode = #tpu.pipeline_mode<synchronous>, transform_indices = @transform_2, window_bounds = array<i64: 1, 128>}, {pipeline_mode = #tpu.pipeline_mode<synchronous>, transform_indices = @transform_3, window_bounds = array<i64: 128, 128>}, {pipeline_mode = #tpu.pipeline_mode<synchronous>, transform_indices = @transform_4, window_bounds = array<i64: 1, 128>}, {transform_indices = @transform_5, window_bounds = array<i64: 8, 128>}, {transform_indices = @transform_6, window_bounds = array<i64: 8, 128>}]} {
    %c0 = arith.constant 0 : index
    %c0_0 = arith.constant 0 : index
    %0 = vector.load %arg1[%c0, %c0_0] : memref<8x128xf32, #tpu.memory_space<vmem>>, vector<8x128xf32>
    %c0_1 = arith.constant 0 : index
    %c0_2 = arith.constant 0 : index
    %1 = vector.load %arg2[%c0_1, %c0_2] : memref<128x128xf32, #tpu.memory_space<vmem>>, vector<128x128xf32>
    %cst = arith.constant dense<0.000000e+00> : vector<8x128xf32>
    %2 = tpu.matmul %0, %1, %cst {dimension_numbers = #tpu.dot_dimension_numbers<[1], [0], [0], [1], [0, 0, 1, 1], [], []>} : vector<8x128xf32>, vector<128x128xf32>, vector<8x128xf32> -> vector<8x128xf32>
    %c0_3 = arith.constant 0 : index
    %c0_4 = arith.constant 0 : index
    %3 = vector.load %arg3[%c0_3, %c0_4] : memref<1x128xf32, #tpu.memory_space<vmem>>, vector<1x128xf32>
    %4 = vector.broadcast %3 : vector<1x128xf32> to vector<8x128xf32>
    %5 = arith.addf %2, %4 : vector<8x128xf32>
    %cst_5 = arith.constant 0.000000e+00 : f32
    %6 = vector.broadcast %cst_5 : f32 to vector<8x128xf32>
    %7 = arith.maximumf %5, %6 : vector<8x128xf32>
    %c0_6 = arith.constant 0 : index
    %c0_7 = arith.constant 0 : index
    %8 = vector.load %arg7[%c0_6, %c0_7] : memref<8x128xf32, #tpu.memory_space<vmem>>, vector<8x128xf32>
    tpu.vector_store %arg7[%c0_6, %c0_7], %7 {strides = array<i32>} : memref<8x128xf32, #tpu.memory_space<vmem>>, vector<8x128xf32>,
    %c0_8 = arith.constant 0 : index
    %c0_9 = arith.constant 0 : index
    %9 = vector.load %arg4[%c0_8, %c0_9] : memref<128x128xf32, #tpu.memory_space<vmem>>, vector<128x128xf32>
    %cst_10 = arith.constant dense<0.000000e+00> : vector<8x128xf32>
    %10 = tpu.matmul %7, %9, %cst_10 {dimension_numbers = #tpu.dot_dimension_numbers<[1], [0], [0], [1], [0, 0, 1, 1], [], []>} : vector<8x128xf32>, vector<128x128xf32>, vector<8x128xf32> -> vector<8x128xf32>
    %c0_11 = arith.constant 0 : index
    %c0_12 = arith.constant 0 : index
    %11 = vector.load %arg5[%c0_11, %c0_12] : memref<1x128xf32, #tpu.memory_space<vmem>>, vector<1x128xf32>
    %12 = vector.broadcast %11 : vector<1x128xf32> to vector<8x128xf32>
    %13 = arith.addf %10, %12 : vector<8x128xf32>
    %c0_13 = arith.constant 0 : index
    %c0_14 = arith.constant 0 : index
    %14 = vector.load %arg6[%c0_13, %c0_14] : memref<8x128xf32, #tpu.memory_space<vmem>>, vector<8x128xf32>
    tpu.vector_store %arg6[%c0_13, %c0_14], %13 {strides = array<i32>} : memref<8x128xf32, #tpu.memory_space<vmem>>, vector<8x128xf32>,
    return
  }
  func.func @transform_0(%arg0: i32) -> (i32, i32) {
    %c0_i32 = arith.constant 0 : i32
    %c0_i32_0 = arith.constant 0 : i32
    return %arg0, %c0_i32 : i32, i32
  }
  func.func @transform_1(%arg0: i32) -> (i32, i32) {
    %c0_i32 = arith.constant 0 : i32
    %c0_i32_0 = arith.constant 0 : i32
    %c0_i32_1 = arith.constant 0 : i32
    return %c0_i32, %c0_i32_0 : i32, i32
  }
  func.func @transform_2(%arg0: i32) -> (i32, i32) {
    %c0_i32 = arith.constant 0 : i32
    %c0_i32_0 = arith.constant 0 : i32
    %c0_i32_1 = arith.constant 0 : i32
    return %c0_i32, %c0_i32_0 : i32, i32
  }
  func.func @transform_3(%arg0: i32) -> (i32, i32) {
    %c0_i32 = arith.constant 0 : i32
    %c0_i32_0 = arith.constant 0 : i32
    %c0_i32_1 = arith.constant 0 : i32
    return %c0_i32, %c0_i32_0 : i32, i32
  }
  func.func @transform_4(%arg0: i32) -> (i32, i32) {
    %c0_i32 = arith.constant 0 : i32
    %c0_i32_0 = arith.constant 0 : i32
    %c0_i32_1 = arith.constant 0 : i32
    return %c0_i32, %c0_i32_0 : i32, i32
  }
  func.func @transform_5(%arg0: i32) -> (i32, i32) {
    %c0_i32 = arith.constant 0 : i32
    %c0_i32_0 = arith.constant 0 : i32
    return %arg0, %c0_i32 : i32, i32
  }
  func.func @transform_6(%arg0: i32) -> (i32, i32) {
    %c0_i32 = arith.constant 0 : i32
    %c0_i32_0 = arith.constant 0 : i32
    return %arg0, %c0_i32 : i32, i32
  }
}

</mosaic_0001>

<llo_original>
// kernel: tpu_custom_call.1
$region0: #{tpu_custom_call.1}
  #allocation0 [shape = 'u32[]', space=smem, size = 0x4, offset = 0x4, fixed_abs, tag = 'smem constant byte address 0x4 - core index']
  #allocation1 [shape = 'u32[72,128]{1,0:T(1,128)}', space=vmem, size = 0x9000, scoped, tag = 'internal scratch']
  %s0 = inlined_call_operand.hbm [shape: f32[8,128], index: 0, kind: input, shape index: {}]
  %s1 = inlined_call_operand.hbm [shape: f32[128,128], index: 1, kind: input, shape index: {}]
  %s2 = inlined_call_operand.vmem [shape: f32[1,128], index: 2, kind: input, shape index: {}]
  %s3 = inlined_call_operand.hbm [shape: f32[128,128], index: 3, kind: input, shape index: {}]
  %s4 = inlined_call_operand.vmem [shape: f32[1,128], index: 4, kind: input, shape index: {}]
  %s5 = inlined_call_operand.hbm [shape: f32[8,128], index: 5, kind: output, shape index: {0}]
  %s6 = inlined_call_operand.hbm [shape: f32[8,128], index: 6, kind: output, shape index: {1}]
  %7 = xla_tuple %s5, %s6
  %s8 = sld [smem:[#allocation0]]
  $region50: #{tpu_custom_call.1} parent=0
    _
  %s10 = ssub.s32 1, %s8
  %s11 = scalar_select 0, %s10, %s8
  $region1: #{tpu_custom_call.1} parent=0
    #allocation2 [shape = 'u8[4096]{0}', space=vmem, size = 0x1000, scoped, tag = 'input window, operand 0, single buffered']
    #allocation3 [shape = 's32[1]{0}', space=sflag, size = 0x4, scoped, tag = 'scoped memory for tpu_custom_call.1']
    #allocation4 [shape = 's32[1]{0}', space=sflag, size = 0x4, scoped, tag = 'scoped memory for tpu_custom_call.1']
    #allocation5 [shape = 'u8[65536]{0}', space=vmem, size = 0x10000, scoped, tag = 'input window, operand 1, single buffered']
    #allocation6 [shape = 's32[1]{0}', space=sflag, size = 0x4, scoped, tag = 'scoped memory for tpu_custom_call.1']
    #allocation7 [shape = 'u8[65536]{0}', space=vmem, size = 0x10000, scoped, tag = 'input window, operand 3, single buffered']
    #allocation8 [shape = 'u8[4096]{0}', space=vmem, size = 0x1000, scoped, tag = 'output window, operand 0, single buffered']
    #allocation9 [shape = 'u8[4096]{0}', space=vmem, size = 0x1000, scoped, tag = 'output window, operand 1, single buffered']
    #allocation10 [shape = 's32[1]{0}', space=sflag, size = 0x4, scoped, tag = 'scoped memory for tpu_custom_call.1']
    %12 = vsyncpa [#allocation3], 0
    %13 = vsyncpa [#allocation6], 0
    %14 = vsyncpa [#allocation4], 0
    %15 = vsyncpa [#allocation10], 0
    // Predicated region
    $region2: #{tpu_custom_call.1} parent=1 // pred_check
      _
    $region3: #{tpu_custom_call.1} parent=1 // pred_check_branch
      %17 = sbr.rel (0) target = $region5
    $region4: #{tpu_custom_call.1} parent=1 // pred_region
      %19 = vsyncadd [#allocation3], 0
      %s21 = sshll.u32 %s0, 4
      %s22 = int_to_ptr.hbm [resolvable:$true] %s21
      %s23 = sshll.u32 [#allocation2], 4
      %s24 = int_to_ptr.vmem [resolvable:$true] %s23
      %26 = dma.hbm_to_vmem [thread:$0]  %s22, 128, %s24, [#allocation3]
    $region5: #{tpu_custom_call.1} parent=1 // pred_fallthru
      _
    // Predicated region
    $region6: #{tpu_custom_call.1} parent=1 // pred_check
      _
    $region7: #{tpu_custom_call.1} parent=1 // pred_check_branch
      %28 = sbr.rel (0) target = $region9
    $region8: #{tpu_custom_call.1} parent=1 // pred_region
      %30 = vsyncadd [#allocation6], 0
      %s31 = sshll.u32 %s1, 4
      %s32 = int_to_ptr.hbm [resolvable:$true] %s31
      %s33 = sshll.u32 [#allocation5], 4
      %s34 = int_to_ptr.vmem [resolvable:$true] %s33
      %39 = dma.hbm_to_vmem [thread:$0]  %s32, 2048, %s34, [#allocation6], 128, 128, 8
    $region9: #{tpu_custom_call.1} parent=1 // pred_fallthru
      _
    // Predicated region
    $region10: #{tpu_custom_call.1} parent=1 // pred_check
      _
    $region11: #{tpu_custom_call.1} parent=1 // pred_check_branch
      %41 = sbr.rel (0) target = $region13
    $region12: #{tpu_custom_call.1} parent=1 // pred_region
      _
    $region13: #{tpu_custom_call.1} parent=1 // pred_fallthru
      _
    // Predicated region
    $region14: #{tpu_custom_call.1} parent=1 // pred_check
      _
    $region15: #{tpu_custom_call.1} parent=1 // pred_check_branch
      %43 = sbr.rel (0) target = $region17
    $region16: #{tpu_custom_call.1} parent=1 // pred_region
      %45 = vsyncadd [#allocation6], 0
      %s46 = sshll.u32 %s3, 4
      %s47 = int_to_ptr.hbm [resolvable:$true] %s46
      %s48 = sshll.u32 [#allocation7], 4
      %s49 = int_to_ptr.vmem [resolvable:$true] %s48
      %54 = dma.hbm_to_vmem [thread:$0]  %s47, 2048, %s49, [#allocation6], 128, 128, 8
    $region17: #{tpu_custom_call.1} parent=1 // pred_fallthru
      _
    // Predicated region
    $region18: #{tpu_custom_call.1} parent=1 // pred_check
      _
    $region19: #{tpu_custom_call.1} parent=1 // pred_check_branch
      %56 = sbr.rel (0) target = $region21
    $region20: #{tpu_custom_call.1} parent=1 // pred_region
      _
    $region21: #{tpu_custom_call.1} parent=1 // pred_fallthru
      _
    // Predicated region
    $region22: #{tpu_custom_call.1} parent=1 // pred_check
      _
    $region23: #{tpu_custom_call.1} parent=1 // pred_check_branch
      %58 = sbr.rel (0) target = $region25
    $region24: #{tpu_custom_call.1} parent=1 // pred_region
      %60 = dma.done [#allocation3], 128
    $region25: #{tpu_custom_call.1} parent=1 // pred_fallthru
      _
    // Predicated region
    $region26: #{tpu_custom_call.1} parent=1 // pred_check
      _
    $region27: #{tpu_custom_call.1} parent=1 // pred_check_branch
      %62 = sbr.rel (0) target = $region29
    $region28: #{tpu_custom_call.1} parent=1 // pred_region
      %64 = dma.done [#allocation6], 2048
    $region29: #{tpu_custom_call.1} parent=1 // pred_fallthru
      _
    // Predicated region
    $region30: #{tpu_custom_call.1} parent=1 // pred_check
      _
    $region31: #{tpu_custom_call.1} parent=1 // pred_check_branch
      %66 = sbr.rel (0) target = $region33
    $region32: #{tpu_custom_call.1} parent=1 // pred_region
      %68 = dma.done [#allocation6], 2048
    $region33: #{tpu_custom_call.1} parent=1 // pred_fallthru
      _
    %v69 = vld [vmem:[#allocation2] sm:$0xff]
    %v70 = vld [vmem:[#allocation5] sm:$0xff]
    %v71 = vld [vmem:[#allocation5 + $0x8] sm:$0xff]
    %v72 = vld [vmem:[#allocation5 + $0x10] sm:$0xff]
    %v73 = vld [vmem:[#allocation5 + $0x18] sm:$0xff]
    %v74 = vld [vmem:[#allocation5 + $0x20] sm:$0xff]
    %v75 = vld [vmem:[#allocation5 + $0x28] sm:$0xff]
    %v76 = vld [vmem:[#allocation5 + $0x30] sm:$0xff]
    %v77 = vld [vmem:[#allocation5 + $0x38] sm:$0xff]
    %v78 = vld [vmem:[#allocation5 + $0x40] sm:$0xff]
    %v79 = vld [vmem:[#allocation5 + $0x48] sm:$0xff]
    %v80 = vld [vmem:[#allocation5 + $0x50] sm:$0xff]
    %v81 = vld [vmem:[#allocation5 + $0x58] sm:$0xff]
    %v82 = vld [vmem:[#allocation5 + $0x60] sm:$0xff]
    %v83 = vld [vmem:[#allocation5 + $0x68] sm:$0xff]
    %v84 = vld [vmem:[#allocation5 + $0x70] sm:$0xff]
    %v85 = vld [vmem:[#allocation5 + $0x78] sm:$0xff]
    %v86 = vld [vmem:[%s2] sm:$0x1]
    %v88 = vperm.slane %v86, 0
    %90 = vmatpush.msra.mxu0 %v85
    %91 = vmatpush.msra.mxu0 %v84
    %92 = vmatpush.msra.mxu0 %v83
    %93 = vmatpush.msra.mxu0 %v82
    %94 = vmatpush.msra.mxu0 %v81
    %95 = vmatpush.msra.mxu0 %v80
    %96 = vmatpush.msra.mxu0 %v79
    %97 = vmatpush.msra.mxu0 %v78
    %98 = vmatpush.msra.mxu0 %v77
    %99 = vmatpush.msra.mxu0 %v76
    %100 = vmatpush.msra.mxu0 %v75
    %101 = vmatpush.msra.mxu0 %v74
    %102 = vmatpush.msra.mxu0 %v73
    %103 = vmatpush.msra.mxu0 %v72
    %104 = vmatpush.msra.mxu0 %v71
    %105 = vmatpush.msra.mxu0 %v70
    %106 = vmatmul.f32.gmra.mxu0 %v69
    %v107 = vpop.f32.mrf.mxu0
    %v108 = vadd.f32 %v88, %v107
    %109 = vdwg.mxu0
    %v110 = vmax.f32 %v108, 0.0
    %111 = vst [vmem:[#allocation9] sm:$0xff] %v110
    %v112 = vld [vmem:[#allocation7] sm:$0xff]
    %v113 = vld [vmem:[#allocation7 + $0x8] sm:$0xff]
    %v114 = vld [vmem:[#allocation7 + $0x10] sm:$0xff]
    %v115 = vld [vmem:[#allocation7 + $0x18] sm:$0xff]
    %v116 = vld [vmem:[#allocation7 + $0x20] sm:$0xff]
    %v117 = vld [vmem:[#allocation7 + $0x28] sm:$0xff]
    %v118 = vld [vmem:[#allocation7 + $0x30] sm:$0xff]
    %v119 = vld [vmem:[#allocation7 + $0x38] sm:$0xff]
    %v120 = vld [vmem:[#allocation7 + $0x40] sm:$0xff]
    %v121 = vld [vmem:[#allocation7 + $0x48] sm:$0xff]
    %v122 = vld [vmem:[#allocation7 + $0x50] sm:$0xff]
    %v123 = vld [vmem:[#allocation7 + $0x58] sm:$0xff]
    %v124 = vld [vmem:[#allocation7 + $0x60] sm:$0xff]
    %v125 = vld [vmem:[#allocation7 + $0x68] sm:$0xff]
    %v126 = vld [vmem:[#allocation7 + $0x70] sm:$0xff]
    %v127 = vld [vmem:[#allocation7 + $0x78] sm:$0xff]
    %v128 = vld [vmem:[%s4] sm:$0x1]
    %v130 = vperm.slane %v128, 0
    %132 = vmatpush.msra.mxu0 %v127
    %133 = vmatpush.msra.mxu0 %v126
    %134 = vmatpush.msra.mxu0 %v125
    %135 = vmatpush.msra.mxu0 %v124
    %136 = vmatpush.msra.mxu0 %v123
    %137 = vmatpush.msra.mxu0 %v122
    %138 = vmatpush.msra.mxu0 %v121
    %139 = vmatpush.msra.mxu0 %v120
    %140 = vmatpush.msra.mxu0 %v119
    %141 = vmatpush.msra.mxu0 %v118
    %142 = vmatpush.msra.mxu0 %v117
    %143 = vmatpush.msra.mxu0 %v116
    %144 = vmatpush.msra.mxu0 %v115
    %145 = vmatpush.msra.mxu0 %v114
    %146 = vmatpush.msra.mxu0 %v113
    %147 = vmatpush.msra.mxu0 %v112
    %148 = vmatmul.f32.gmra.mxu0 %v110
    %v149 = vpop.f32.mrf.mxu0
    %v150 = vadd.f32 %v130, %v149
    %151 = vdwg.mxu0
    %152 = vst [vmem:[#allocation8] sm:$0xff] %v150
    // Predicated region
    $region34: #{tpu_custom_call.1} parent=1 // pred_check
      _
    $region35: #{tpu_custom_call.1} parent=1 // pred_check_branch
      %154 = sbr.rel (0) target = $region37
    $region36: #{tpu_custom_call.1} parent=1 // pred_region
      %156 = vsyncadd [#allocation4], 0
      %s158 = sshll.u32 [#allocation8], 4
      %s159 = int_to_ptr.vmem [resolvable:$true] %s158
      %s160 = sshll.u32 %s5, 4
      %s161 = int_to_ptr.hbm [resolvable:$true] %s160
      %163 = dma.vmem_to_hbm [thread:$0]  %s159, 128, %s161, [#allocation4]
    $region37: #{tpu_custom_call.1} parent=1 // pred_fallthru
      _
    // Predicated region
    $region38: #{tpu_custom_call.1} parent=1 // pred_check
      _
    $region39: #{tpu_custom_call.1} parent=1 // pred_check_branch
      %165 = sbr.rel (0) target = $region41
    $region40: #{tpu_custom_call.1} parent=1 // pred_region
      %167 = vsyncadd [#allocation10], 0
      %s169 = sshll.u32 [#allocation9], 4
      %s170 = int_to_ptr.vmem [resolvable:$true] %s169
      %s171 = sshll.u32 %s6, 4
      %s172 = int_to_ptr.hbm [resolvable:$true] %s171
      %174 = dma.vmem_to_hbm [thread:$0]  %s170, 128, %s172, [#allocation10]
    $region41: #{tpu_custom_call.1} parent=1 // pred_fallthru
      _
    // Predicated region
    $region42: #{tpu_custom_call.1} parent=1 // pred_check
      _
    $region43: #{tpu_custom_call.1} parent=1 // pred_check_branch
      %176 = sbr.rel (0) target = $region45
    $region44: #{tpu_custom_call.1} parent=1 // pred_region
      %178 = dma.done [#allocation4], 128
    $region45: #{tpu_custom_call.1} parent=1 // pred_fallthru
      _
    // Predicated region
    $region46: #{tpu_custom_call.1} parent=1 // pred_check
      _
    $region47: #{tpu_custom_call.1} parent=1 // pred_check_branch
      %180 = sbr.rel (0) target = $region49
    $region48: #{tpu_custom_call.1} parent=1 // pred_region
      %182 = dma.done [#allocation10], 128
    $region49: #{tpu_custom_call.1} parent=1 // pred_fallthru
      _
    %183 = vsyncpa [#allocation3], 1
    %184 = vsyncpa [#allocation6], 1
    %185 = vsyncpa [#allocation4], 1
    %186 = vsyncpa [#allocation10], 1

</llo_original>
